<compile_context>
chip_gen: v6e
topology: v6e:2x2x1
jax: 0.10.0
libtpu: 0.0.40
codegen_flags: <defaults>
</compile_context>

<pallas_src>
import functools

import jax
import jax.numpy as jnp
from jax import lax
from jax.experimental import pallas as pl
from jax.experimental.pallas import tpu as pltpu


def _basic_block_kernel(x_ref, w1_ref, b1_ref, w2_ref, b2_ref, o_ref,
                        xpad1, xpad2, *, Nb, H, W, C, compute_dtype):
    Hp, Wp = H + 2, W + 2
    WC, WpC = W * C, Wp * C
    M = Nb * Hp - 2                       # MXU M rows per dot (all Nb images)

    # Zero the padded scratches every grid step (multi-core safe; the border
    # rows / lane-pad columns must be zero and are never written below).
    xpad1[...] = jnp.zeros_like(xpad1)
    xpad2[...] = jnp.zeros_like(xpad2)

    xs = [x_ref[n] for n in range(Nb)]    # each (H, W*C); residual kept f32

    # Fill conv1 input: interior rows / interior lanes of padded scratch #1.
    for n in range(Nb):
        xpad1[pl.ds(n * Hp + 1, H), pl.ds(C, WC)] = xs[n].astype(compute_dtype)

    def conv3x3_bn(xpad, w_ref, b_ref):
        # kw taps are pre-folded into the ((W+2)*Cin, W*Cout) weight, so the
        # conv is 3 lane-aligned, f32-accumulated MXU dots over kh row slabs.
        acc = jnp.dot(xpad[pl.ds(0, M), :], w_ref[0],
                      preferred_element_type=jnp.float32)
        for kh in (1, 2):
            acc += jnp.dot(xpad[pl.ds(kh, M), :], w_ref[kh],
                           preferred_element_type=jnp.float32)
        return acc + b_ref[...]           # (M, W*C) f32, BN bias broadcast

    acc1 = conv3x3_bn(xpad1, w1_ref, b1_ref)

    # ReLU, then write conv2's input into padded scratch #2.  Rows between
    # images in `acc1` are cross-image garbage and are simply never read.
    for n in range(Nb):
        y1 = jnp.maximum(acc1[n * Hp:n * Hp + H, :], 0.0)
        xpad2[pl.ds(n * Hp + 1, H), pl.ds(C, WC)] = y1.astype(compute_dtype)

    acc2 = conv3x3_bn(xpad2, w2_ref, b2_ref)

    # Residual add + ReLU epilogue in f32; lane-dense (W*C=128k) stores.
    for n in range(Nb):
        y = acc2[n * Hp:n * Hp + H, :] + xs[n].astype(jnp.float32)
        o_ref[n] = jnp.maximum(y, 0.0).astype(o_ref.dtype)


def _fold_bn(gamma, beta, running_mean, running_var, eps=1e-5):
    # TODO(synk): PyTorch BatchNorm in train() mode uses batch statistics and
    # updates running stats; here BN is folded as eval-mode affine.
    scale = gamma / jnp.sqrt(running_var + eps)
    bias = beta - running_mean * scale
    return scale.astype(jnp.float32), bias.astype(jnp.float32)


def _expand_conv_weight(w_hwio, bn_scale, W, dtype):
    """Fold BN scale into the 3x3 weight and fold the kw (horizontal) taps into
    a per-kh ((W+2)*Cin, W*Cout) matrix, so conv = sum_kh slab_kh @ weight[kh]
    over kh-shifted row slabs of the zero-padded (H+2, (W+2)*Cin) activation."""
    Cin, Cout = w_hwio.shape[2], w_hwio.shape[3]
    Wp = W + 2
    w = w_hwio.astype(jnp.float32) * bn_scale[None, None, None, :]  # (3,3,Ci,Co)
    wp_idx = jnp.arange(Wp)[:, None]          # padded column w' = w + kw
    w_idx = jnp.arange(W)[None, :]            # output column w
    kw = wp_idx - w_idx                       # (Wp, W)
    valid = (kw >= 0) & (kw <= 2)
    sel = w[:, jnp.clip(kw, 0, 2), :, :]      # (3, Wp, W, Cin, Cout)
    sel = sel * valid[None, :, :, None, None].astype(jnp.float32)
    big = jnp.transpose(sel, (0, 1, 3, 2, 4))  # (3, Wp, Cin, W, Cout)
    return big.reshape(3, Wp * Cin, W * Cout).astype(dtype)


def _pick_batch_block(N, H, target_rows=512):
    """Largest divisor of N keeping the stacked padded rows (MXU M dim) within
    a VMEM-friendly cap while maximizing M (target >=128 on v5e, >=256 v6e/v7x)."""
    best = 1
    for nb in range(1, N + 1):
        if N % nb == 0 and nb * (H + 2) <= target_rows:
            best = nb
    return best


def basic_block_forward_nhwc(x_nhwc, params, *, compute_dtype=jnp.bfloat16,
                             batch_block=None):
    N, H, W, C = x_nhwc.shape
    assert params["w1"].shape == (3, 3, C, C), "BasicBlock: inplanes == planes"
    WC, Wp = W * C, W + 2
    WpC = Wp * C
    Nb = batch_block if batch_block is not None else _pick_batch_block(N, H)
    assert N % Nb == 0

    s1, b1 = _fold_bn(*params["bn1"])
    s2, b2 = _fold_bn(*params["bn2"])
    w1 = _expand_conv_weight(params["w1"], s1, W, compute_dtype)
    w2 = _expand_conv_weight(params["w2"], s2, W, compute_dtype)
    b1 = jnp.tile(b1, W).reshape(1, WC)       # f32 bias per (w, c) lane
    b2 = jnp.tile(b2, W).reshape(1, WC)

    x2d = x_nhwc.reshape(N, H, WC)            # free reshape, lane-dense

    kernel = functools.partial(_basic_block_kernel, Nb=Nb, H=H, W=W, C=C,
                               compute_dtype=compute_dtype)
    out = pl.pallas_call(
        kernel,
        out_shape=jax.ShapeDtypeStruct((N, H, WC), x_nhwc.dtype),
        grid_spec=pltpu.PrefetchScalarGridSpec(
            num_scalar_prefetch=0,
            grid=(N // Nb,),
            in_specs=[
                pl.BlockSpec((Nb, H, WC), lambda g: (g, 0, 0)),
                pl.BlockSpec((3, WpC, WC), lambda g: (0, 0, 0)),  # constant ->
                pl.BlockSpec((1, WC), lambda g: (0, 0)),          # DMA'd once,
                pl.BlockSpec((3, WpC, WC), lambda g: (0, 0, 0)),  # VMEM-resident
                pl.BlockSpec((1, WC), lambda g: (0, 0)),
            ],
            out_specs=pl.BlockSpec((Nb, H, WC), lambda g: (g, 0, 0)),
            scratch_shapes=[
                pltpu.VMEM((Nb * (H + 2), WpC), compute_dtype),   # padded conv1 in
                pltpu.VMEM((Nb * (H + 2), WpC), compute_dtype),   # padded conv2 in
            ],
        ),
        compiler_params=pltpu.CompilerParams(
            dimension_semantics=("parallel",)),   # v7x: shard batch over 2 TCs
    )(x2d, w1, b1, w2, b2)
    return out.reshape(N, H, W, C)


def basic_block_forward(x_nchw, params, *, compute_dtype=jnp.bfloat16,
                        batch_block=None):
    """BasicBlock.forward (stride=1, downsample=None), NCHW in/out."""
    # TODO(synk): these NCHW<->NHWC transposes are extra HBM passes outside the
    # kernel; drop them if the surrounding model already carries NHWC.
    x = jnp.transpose(x_nchw, (0, 2, 3, 1))
    out = basic_block_forward_nhwc(x, params, compute_dtype=compute_dtype,
                                   batch_block=batch_block)
    return jnp.transpose(out, (0, 3, 1, 2))


def _reference_forward(x_nchw, params):
    """Pure-JAX reference (lax.conv) with identical semantics."""
    x = jnp.transpose(x_nchw, (0, 2, 3, 1))
    s1, b1 = _fold_bn(*params["bn1"])
    s2, b2 = _fold_bn(*params["bn2"])
    dn = ("NHWC", "HWIO", "NHWC")
    y = lax.conv_general_dilated(x, params["w1"], (1, 1), ((1, 1), (1, 1)),
                                 dimension_numbers=dn,
                                 precision=lax.Precision.HIGHEST)
    y = jnp.maximum(y * s1 + b1, 0.0)
    y = lax.conv_general_dilated(y, params["w2"], (1, 1), ((1, 1), (1, 1)),
                                 dimension_numbers=dn,
                                 precision=lax.Precision.HIGHEST)
    y = jnp.maximum(y * s2 + b2 + x, 0.0)
    return jnp.transpose(y, (0, 3, 1, 2))


if __name__ == "__main__":
    N, C, H, W = 2, 8, 16, 16      # inplanes == planes == 8; W*C = 128 lanes
    key = jax.random.PRNGKey(0)
    keys = jax.random.split(key, 11)

    x = jax.random.normal(keys[0], (N, C, H, W), jnp.float32)

    params = {
        # conv weights in HWIO layout (3, 3, Cin, Cout)
        "w1": 0.1 * jax.random.normal(keys[1], (3, 3, C, C), jnp.float32),
        "w2": 0.1 * jax.random.normal(keys[2], (3, 3, C, C), jnp.float32),
        # BN params: (gamma, beta, running_mean, running_var)
        "bn1": (
            jax.random.uniform(keys[3], (C,), jnp.float32, 0.5, 1.5),
            0.1 * jax.random.normal(keys[4], (C,), jnp.float32),
            0.1 * jax.random.normal(keys[5], (C,), jnp.float32),
            jax.random.uniform(keys[6], (C,), jnp.float32, 0.5, 1.5),
        ),
        "bn2": (
            jax.random.uniform(keys[7], (C,), jnp.float32, 0.5, 1.5),
            0.1 * jax.random.normal(keys[8], (C,), jnp.float32),
            0.1 * jax.random.normal(keys[9], (C,), jnp.float32),
            jax.random.uniform(keys[10], (C,), jnp.float32, 0.5, 1.5),
        ),
    }

    ref = jax.block_until_ready(_reference_forward(x, params))

    # f32 matmul-input path (batched: both images in one grid step)
    out_f32 = jax.block_until_ready(
        basic_block_forward(x, params, compute_dtype=jnp.float32))
    assert out_f32.shape == (N, C, H, W)
    err = float(jnp.max(jnp.abs(out_f32 - ref)))
    assert err < 2e-3, f"f32 max abs err {err}"

    # default bf16 matmul-input path (f32 accumulation / epilogue)
    out_bf16 = jax.block_until_ready(basic_block_forward(x, params))
    err_bf16 = float(jnp.max(jnp.abs(out_bf16 - ref)))
    assert err_bf16 < 5e-2, f"bf16 max abs err {err_bf16}"

    # multi-grid-step path (batch_block=1 -> grid=(2,)): exercises per-step
    # scratch re-zeroing and the pipelined batch loop.
    out_g2 = jax.block_until_ready(
        basic_block_forward(x, params, compute_dtype=jnp.float32,
                            batch_block=1))
    err_g2 = float(jnp.max(jnp.abs(out_g2 - ref)))
    assert err_g2 < 2e-3, f"grid=2 f32 max abs err {err_g2}"

    print("KERNEL_OK")
</pallas_src>

<mosaic_0001>
module attributes {stable_mosaic.version = 11 : i64} {
  func.func @_basic_block_kernel(%arg0: i32, %arg1: memref<2x16x128xf32, #tpu.memory_space<vmem>>, %arg2: memref<3x144x128xf32, #tpu.memory_space<vmem>>, %arg3: memref<1x128xf32, #tpu.memory_space<vmem>>, %arg4: memref<3x144x128xf32, #tpu.memory_space<vmem>>, %arg5: memref<1x128xf32, #tpu.memory_space<vmem>>, %arg6: memref<2x16x128xf32, #tpu.memory_space<vmem>>, %arg7: memref<36x144xf32, #tpu.memory_space<vmem>>, %arg8: memref<36x144xf32, #tpu.memory_space<vmem>>) attributes {dimension_semantics = [#tpu.dimension_semantics<parallel>], iteration_bounds = array<i64: 1>, scalar_prefetch = 0 : i64, scratch_operands = 2 : i64, tpu.core_type = #tpu.core_type<tc>, window_params = [{transform_indices = @transform_0, window_bounds = array<i64: 2, 16, 128>}, {pipeline_mode = #tpu.pipeline_mode<synchronous>, transform_indices = @transform_1, window_bounds = array<i64: 3, 144, 128>}, {pipeline_mode = #tpu.pipeline_mode<synchronous>, transform_indices = @transform_2, window_bounds = array<i64: 1, 128>}, {pipeline_mode = #tpu.pipeline_mode<synchronous>, transform_indices = @transform_3, window_bounds = array<i64: 3, 144, 128>}, {pipeline_mode = #tpu.pipeline_mode<synchronous>, transform_indices = @transform_4, window_bounds = array<i64: 1, 128>}, {transform_indices = @transform_5, window_bounds = array<i64: 2, 16, 128>}]} {
    %cst = arith.constant 0.000000e+00 : f32
    %0 = vector.broadcast %cst : f32 to vector<36x144xf32>
    %c0 = arith.constant 0 : index
    %c0_0 = arith.constant 0 : index
    %1 = vector.load %arg7[%c0, %c0_0] : memref<36x144xf32, #tpu.memory_space<vmem>>, vector<36x144xf32>
    tpu.vector_store %arg7[%c0, %c0_0], %0 {strides = array<i32>} : memref<36x144xf32, #tpu.memory_space<vmem>>, vector<36x144xf32>,
    %cst_1 = arith.constant 0.000000e+00 : f32
    %2 = vector.broadcast %cst_1 : f32 to vector<36x144xf32>
    %c0_2 = arith.constant 0 : index
    %c0_3 = arith.constant 0 : index
    %3 = vector.load %arg8[%c0_2, %c0_3] : memref<36x144xf32, #tpu.memory_space<vmem>>, vector<36x144xf32>
    tpu.vector_store %arg8[%c0_2, %c0_3], %2 {strides = array<i32>} : memref<36x144xf32, #tpu.memory_space<vmem>>, vector<36x144xf32>,
    %c0_4 = arith.constant 0 : index
    %c0_5 = arith.constant 0 : index
    %c0_6 = arith.constant 0 : index
    %4 = vector.load %arg1[%c0_4, %c0_5, %c0_6] : memref<2x16x128xf32, #tpu.memory_space<vmem>>, vector<1x16x128xf32>
    %5 = vector.shape_cast %4 : vector<1x16x128xf32> to vector<16x128xf32>
    %c1 = arith.constant 1 : index
    %c0_7 = arith.constant 0 : index
    %c0_8 = arith.constant 0 : index
    %6 = vector.load %arg1[%c1, %c0_7, %c0_8] : memref<2x16x128xf32, #tpu.memory_space<vmem>>, vector<1x16x128xf32>
    %7 = vector.shape_cast %6 : vector<1x16x128xf32> to vector<16x128xf32>
    %c1_9 = arith.constant 1 : index
    %c8 = arith.constant 8 : index
    %8 = vector.load %arg7[%c1_9, %c8] : memref<36x144xf32, #tpu.memory_space<vmem>>, vector<16x128xf32>
    tpu.vector_store %arg7[%c1_9, %c8], %5 {strides = array<i32>} : memref<36x144xf32, #tpu.memory_space<vmem>>, vector<16x128xf32>,
    %c19 = arith.constant 19 : index
    %c8_10 = arith.constant 8 : index
    %9 = vector.load %arg7[%c19, %c8_10] : memref<36x144xf32, #tpu.memory_space<vmem>>, vector<16x128xf32>
    tpu.vector_store %arg7[%c19, %c8_10], %7 {strides = array<i32>} : memref<36x144xf32, #tpu.memory_space<vmem>>, vector<16x128xf32>,
    %c0_11 = arith.constant 0 : index
    %c0_12 = arith.constant 0 : index
    %10 = vector.load %arg7[%c0_11, %c0_12] : memref<36x144xf32, #tpu.memory_space<vmem>>, vector<34x144xf32>
    %c0_13 = arith.constant 0 : index
    %c0_14 = arith.constant 0 : index
    %c0_15 = arith.constant 0 : index
    %11 = vector.load %arg2[%c0_13, %c0_14, %c0_15] : memref<3x144x128xf32, #tpu.memory_space<vmem>>, vector<1x144x128xf32>
    %12 = vector.shape_cast %11 : vector<1x144x128xf32> to vector<144x128xf32>
    %cst_16 = arith.constant dense<0.000000e+00> : vector<34x128xf32>
    %13 = tpu.matmul %10, %12, %cst_16 {dimension_numbers = #tpu.dot_dimension_numbers<[1], [0], [0], [1], [0, 0, 1, 1], [], []>} : vector<34x144xf32>, vector<144x128xf32>, vector<34x128xf32> -> vector<34x128xf32>
    %c1_17 = arith.constant 1 : index
    %c0_18 = arith.constant 0 : index
    %14 = vector.load %arg7[%c1_17, %c0_18] : memref<36x144xf32, #tpu.memory_space<vmem>>, vector<34x144xf32>
    %c1_19 = arith.constant 1 : index
    %c0_20 = arith.constant 0 : index
    %c0_21 = arith.constant 0 : index
    %15 = vector.load %arg2[%c1_19, %c0_20, %c0_21] : memref<3x144x128xf32, #tpu.memory_space<vmem>>, vector<1x144x128xf32>
    %16 = vector.shape_cast %15 : vector<1x144x128xf32> to vector<144x128xf32>
    %cst_22 = arith.constant dense<0.000000e+00> : vector<34x128xf32>
    %17 = tpu.matmul %14, %16, %cst_22 {dimension_numbers = #tpu.dot_dimension_numbers<[1], [0], [0], [1], [0, 0, 1, 1], [], []>} : vector<34x144xf32>, vector<144x128xf32>, vector<34x128xf32> -> vector<34x128xf32>
    %18 = arith.addf %13, %17 : vector<34x128xf32>
    %c2 = arith.constant 2 : index
    %c0_23 = arith.constant 0 : index
    %19 = vector.load %arg7[%c2, %c0_23] : memref<36x144xf32, #tpu.memory_space<vmem>>, vector<34x144xf32>
    %c2_24 = arith.constant 2 : index
    %c0_25 = arith.constant 0 : index
    %c0_26 = arith.constant 0 : index
    %20 = vector.load %arg2[%c2_24, %c0_25, %c0_26] : memref<3x144x128xf32, #tpu.memory_space<vmem>>, vector<1x144x128xf32>
    %21 = vector.shape_cast %20 : vector<1x144x128xf32> to vector<144x128xf32>
    %cst_27 = arith.constant dense<0.000000e+00> : vector<34x128xf32>
    %22 = tpu.matmul %19, %21, %cst_27 {dimension_numbers = #tpu.dot_dimension_numbers<[1], [0], [0], [1], [0, 0, 1, 1], [], []>} : vector<34x144xf32>, vector<144x128xf32>, vector<34x128xf32> -> vector<34x128xf32>
    %23 = arith.addf %18, %22 : vector<34x128xf32>
    %c0_28 = arith.constant 0 : index
    %c0_29 = arith.constant 0 : index
    %24 = vector.load %arg3[%c0_28, %c0_29] : memref<1x128xf32, #tpu.memory_space<vmem>>, vector<1x128xf32>
    %25 = vector.broadcast %24 : vector<1x128xf32> to vector<34x128xf32>
    %26 = arith.addf %23, %25 : vector<34x128xf32>
    %27 = vector.extract_strided_slice %26 {offsets = [0, 0], sizes = [16, 128], strides = [1, 1]} : vector<34x128xf32> to vector<16x128xf32>
    %cst_30 = arith.constant 0.000000e+00 : f32
    %28 = vector.broadcast %cst_30 : f32 to vector<16x128xf32>
    %29 = arith.maximumf %27, %28 : vector<16x128xf32>
    %c1_31 = arith.constant 1 : index
    %c8_32 = arith.constant 8 : index
    %30 = vector.load %arg8[%c1_31, %c8_32] : memref<36x144xf32, #tpu.memory_space<vmem>>, vector<16x128xf32>
    tpu.vector_store %arg8[%c1_31, %c8_32], %29 {strides = array<i32>} : memref<36x144xf32, #tpu.memory_space<vmem>>, vector<16x128xf32>,
    %31 = vector.extract_strided_slice %26 {offsets = [18, 0], sizes = [16, 128], strides = [1, 1]} : vector<34x128xf32> to vector<16x128xf32>
    %cst_33 = arith.constant 0.000000e+00 : f32
    %32 = vector.broadcast %cst_33 : f32 to vector<16x128xf32>
    %33 = arith.maximumf %31, %32 : vector<16x128xf32>
    %c19_34 = arith.constant 19 : index
    %c8_35 = arith.constant 8 : index
    %34 = vector.load %arg8[%c19_34, %c8_35] : memref<36x144xf32, #tpu.memory_space<vmem>>, vector<16x128xf32>
    tpu.vector_store %arg8[%c19_34, %c8_35], %33 {strides = array<i32>} : memref<36x144xf32, #tpu.memory_space<vmem>>, vector<16x128xf32>,
    %c0_36 = arith.constant 0 : index
    %c0_37 = arith.constant 0 : index
    %35 = vector.load %arg8[%c0_36, %c0_37] : memref<36x144xf32, #tpu.memory_space<vmem>>, vector<34x144xf32>
    %c0_38 = arith.constant 0 : index
    %c0_39 = arith.constant 0 : index
    %c0_40 = arith.constant 0 : index
    %36 = vector.load %arg4[%c0_38, %c0_39, %c0_40] : memref<3x144x128xf32, #tpu.memory_space<vmem>>, vector<1x144x128xf32>
    %37 = vector.shape_cast %36 : vector<1x144x128xf32> to vector<144x128xf32>
    %cst_41 = arith.constant dense<0.000000e+00> : vector<34x128xf32>
    %38 = tpu.matmul %35, %37, %cst_41 {dimension_numbers = #tpu.dot_dimension_numbers<[1], [0], [0], [1], [0, 0, 1, 1], [], []>} : vector<34x144xf32>, vector<144x128xf32>, vector<34x128xf32> -> vector<34x128xf32>
    %c1_42 = arith.constant 1 : index
    %c0_43 = arith.constant 0 : index
    %39 = vector.load %arg8[%c1_42, %c0_43] : memref<36x144xf32, #tpu.memory_space<vmem>>, vector<34x144xf32>
    %c1_44 = arith.constant 1 : index
    %c0_45 = arith.constant 0 : index
    %c0_46 = arith.constant 0 : index
    %40 = vector.load %arg4[%c1_44, %c0_45, %c0_46] : memref<3x144x128xf32, #tpu.memory_space<vmem>>, vector<1x144x128xf32>
    %41 = vector.shape_cast %40 : vector<1x144x128xf32> to vector<144x128xf32>
    %cst_47 = arith.constant dense<0.000000e+00> : vector<34x128xf32>
    %42 = tpu.matmul %39, %41, %cst_47 {dimension_numbers = #tpu.dot_dimension_numbers<[1], [0], [0], [1], [0, 0, 1, 1], [], []>} : vector<34x144xf32>, vector<144x128xf32>, vector<34x128xf32> -> vector<34x128xf32>
    %43 = arith.addf %38, %42 : vector<34x128xf32>
    %c2_48 = arith.constant 2 : index
    %c0_49 = arith.constant 0 : index
    %44 = vector.load %arg8[%c2_48, %c0_49] : memref<36x144xf32, #tpu.memory_space<vmem>>, vector<34x144xf32>
    %c2_50 = arith.constant 2 : index
    %c0_51 = arith.constant 0 : index
    %c0_52 = arith.constant 0 : index
    %45 = vector.load %arg4[%c2_50, %c0_51, %c0_52] : memref<3x144x128xf32, #tpu.memory_space<vmem>>, vector<1x144x128xf32>
    %46 = vector.shape_cast %45 : vector<1x144x128xf32> to vector<144x128xf32>
    %cst_53 = arith.constant dense<0.000000e+00> : vector<34x128xf32>
    %47 = tpu.matmul %44, %46, %cst_53 {dimension_numbers = #tpu.dot_dimension_numbers<[1], [0], [0], [1], [0, 0, 1, 1], [], []>} : vector<34x144xf32>, vector<144x128xf32>, vector<34x128xf32> -> vector<34x128xf32>
    %48 = arith.addf %43, %47 : vector<34x128xf32>
    %c0_54 = arith.constant 0 : index
    %c0_55 = arith.constant 0 : index
    %49 = vector.load %arg5[%c0_54, %c0_55] : memref<1x128xf32, #tpu.memory_space<vmem>>, vector<1x128xf32>
    %50 = vector.broadcast %49 : vector<1x128xf32> to vector<34x128xf32>
    %51 = arith.addf %48, %50 : vector<34x128xf32>
    %52 = vector.extract_strided_slice %51 {offsets = [0, 0], sizes = [16, 128], strides = [1, 1]} : vector<34x128xf32> to vector<16x128xf32>
    %53 = arith.addf %52, %5 : vector<16x128xf32>
    %cst_56 = arith.constant 0.000000e+00 : f32
    %54 = vector.broadcast %cst_56 : f32 to vector<16x128xf32>
    %55 = arith.maximumf %53, %54 : vector<16x128xf32>
    %c0_57 = arith.constant 0 : index
    %c0_58 = arith.constant 0 : index
    %c0_59 = arith.constant 0 : index
    %56 = vector.load %arg6[%c0_57, %c0_58, %c0_59] : memref<2x16x128xf32, #tpu.memory_space<vmem>>, vector<1x16x128xf32>
    %57 = vector.shape_cast %56 : vector<1x16x128xf32> to vector<16x128xf32>
    %58 = vector.shape_cast %55 : vector<16x128xf32> to vector<1x16x128xf32>
    tpu.vector_store %arg6[%c0_57, %c0_58, %c0_59], %58 {strides = array<i32>} : memref<2x16x128xf32, #tpu.memory_space<vmem>>, vector<1x16x128xf32>,
    %59 = vector.extract_strided_slice %51 {offsets = [18, 0], sizes = [16, 128], strides = [1, 1]} : vector<34x128xf32> to vector<16x128xf32>
    %60 = arith.addf %59, %7 : vector<16x128xf32>
    %cst_60 = arith.constant 0.000000e+00 : f32
    %61 = vector.broadcast %cst_60 : f32 to vector<16x128xf32>
    %62 = arith.maximumf %60, %61 : vector<16x128xf32>
    %c1_61 = arith.constant 1 : index
    %c0_62 = arith.constant 0 : index
    %c0_63 = arith.constant 0 : index
    %63 = vector.load %arg6[%c1_61, %c0_62, %c0_63] : memref<2x16x128xf32, #tpu.memory_space<vmem>>, vector<1x16x128xf32>
    %64 = vector.shape_cast %63 : vector<1x16x128xf32> to vector<16x128xf32>
    %65 = vector.shape_cast %62 : vector<16x128xf32> to vector<1x16x128xf32>
    tpu.vector_store %arg6[%c1_61, %c0_62, %c0_63], %65 {strides = array<i32>} : memref<2x16x128xf32, #tpu.memory_space<vmem>>, vector<1x16x128xf32>,
    return
  }
  func.func @transform_0(%arg0: i32) -> (i32, i32, i32) {
    %c0_i32 = arith.constant 0 : i32
    %c0_i32_0 = arith.constant 0 : i32
    %c0_i32_1 = arith.constant 0 : i32
    return %arg0, %c0_i32, %c0_i32_0 : i32, i32, i32
  }
  func.func @transform_1(%arg0: i32) -> (i32, i32, i32) {
    %c0_i32 = arith.constant 0 : i32
    %c0_i32_0 = arith.constant 0 : i32
    %c0_i32_1 = arith.constant 0 : i32
    %c0_i32_2 = arith.constant 0 : i32
    return %c0_i32, %c0_i32_0, %c0_i32_1 : i32, i32, i32
  }
  func.func @transform_2(%arg0: i32) -> (i32, i32) {
    %c0_i32 = arith.constant 0 : i32
    %c0_i32_0 = arith.constant 0 : i32
    %c0_i32_1 = arith.constant 0 : i32
    return %c0_i32, %c0_i32_0 : i32, i32
  }
  func.func @transform_3(%arg0: i32) -> (i32, i32, i32) {
    %c0_i32 = arith.constant 0 : i32
    %c0_i32_0 = arith.constant 0 : i32
    %c0_i32_1 = arith.constant 0 : i32
    %c0_i32_2 = arith.constant 0 : i32
    return %c0_i32, %c0_i32_0, %c0_i32_1 : i32, i32, i32
  }
  func.func @transform_4(%arg0: i32) -> (i32, i32) {
    %c0_i32 = arith.constant 0 : i32
    %c0_i32_0 = arith.constant 0 : i32
    %c0_i32_1 = arith.constant 0 : i32
    return %c0_i32, %c0_i32_0 : i32, i32
  }
  func.func @transform_5(%arg0: i32) -> (i32, i32, i32) {
    %c0_i32 = arith.constant 0 : i32
    %c0_i32_0 = arith.constant 0 : i32
    %c0_i32_1 = arith.constant 0 : i32
    return %arg0, %c0_i32, %c0_i32_0 : i32, i32, i32
  }
}

</mosaic_0001>

<llo_original>
// kernel: tpu_custom_call.1
$region0: #{tpu_custom_call.1}
  #allocation0 [shape = 'u32[]', space=smem, size = 0x4, offset = 0x4, fixed_abs, tag = 'smem constant byte address 0x4 - core index']
  #allocation1 [shape = 'u32[144,128]{1,0:T(1,128)}', space=vmem, size = 0x12000, scoped, tag = 'internal scratch']
  #allocation2 [shape = 'f32[36,144]{1,0:T(8,128)}', space=vmem, size = 0xa000, scoped, tag = 'scratch operand']
  #allocation3 [shape = 'f32[36,144]{1,0:T(8,128)}', space=vmem, size = 0xa000, scoped, tag = 'scratch operand']
  %s0 = inlined_call_operand.hbm [shape: f32[2,16,128], index: 0, kind: input, shape index: {}]
  %s1 = inlined_call_operand.hbm [shape: f32[3,144,128], index: 1, kind: input, shape index: {}]
  %s2 = inlined_call_operand.vmem [shape: f32[1,128], index: 2, kind: input, shape index: {}]
  %s3 = inlined_call_operand.hbm [shape: f32[3,144,128], index: 3, kind: input, shape index: {}]
  %s4 = inlined_call_operand.vmem [shape: f32[1,128], index: 4, kind: input, shape index: {}]
  %s5 = inlined_call_operand.hbm [shape: f32[2,16,128], index: 5, kind: output, shape index: {}]
  %s6 = sld [smem:[#allocation0]]
  $region42: #{tpu_custom_call.1} parent=0
    _
  %s8 = ssub.s32 1, %s6
  %s9 = scalar_select 0, %s8, %s6
  $region1: #{tpu_custom_call.1} parent=0
    #allocation4 [shape = 'u8[16384]{0}', space=vmem, size = 0x4000, scoped, tag = 'input window, operand 0, single buffered']
    #allocation5 [shape = 's32[1]{0}', space=sflag, size = 0x4, scoped, tag = 'scoped memory for tpu_custom_call.1']
    #allocation6 [shape = 's32[1]{0}', space=sflag, size = 0x4, scoped, tag = 'scoped memory for tpu_custom_call.1']
    #allocation7 [shape = 'u8[221184]{0}', space=vmem, size = 0x36000, scoped, tag = 'input window, operand 1, single buffered']
    #allocation8 [shape = 's32[1]{0}', space=sflag, size = 0x4, scoped, tag = 'scoped memory for tpu_custom_call.1']
    #allocation9 [shape = 'u8[221184]{0}', space=vmem, size = 0x36000, scoped, tag = 'input window, operand 3, single buffered']
    #allocation10 [shape = 'u8[16384]{0}', space=vmem, size = 0x4000, scoped, tag = 'output window, operand 0, single buffered']
    %10 = vsyncpa [#allocation5], 0
    %11 = vsyncpa [#allocation8], 0
    %12 = vsyncpa [#allocation6], 0
    // Predicated region
    $region2: #{tpu_custom_call.1} parent=1 // pred_check
      _
    $region3: #{tpu_custom_call.1} parent=1 // pred_check_branch
      %14 = sbr.rel (0) target = $region5
    $region4: #{tpu_custom_call.1} parent=1 // pred_region
      %s16 = ssub.s32 512, 512
      %17 = vsyncadd [#allocation5], %s16
      %s18 = sshll.u32 [#allocation4], 4
      %s19 = int_to_ptr.vmem [resolvable:$true] %s18
      %24 = dma.hbm_to_vmem [thread:$0]  %s0, 512, %s19, [#allocation5], 128, 128, 8
    $region5: #{tpu_custom_call.1} parent=1 // pred_fallthru
      _
    // Predicated region
    $region6: #{tpu_custom_call.1} parent=1 // pred_check
      _
    $region7: #{tpu_custom_call.1} parent=1 // pred_check_branch
      %26 = sbr.rel (0) target = $region9
    $region8: #{tpu_custom_call.1} parent=1 // pred_region
      %s28 = ssub.s32 6912, 6912
      %29 = vsyncadd [#allocation8], %s28
      %s30 = sshll.u32 [#allocation7], 4
      %s31 = int_to_ptr.vmem [resolvable:$true] %s30
      %36 = dma.hbm_to_vmem [thread:$0]  %s1, 6912, %s31, [#allocation8], 128, 128, 8
    $region9: #{tpu_custom_call.1} parent=1 // pred_fallthru
      _
    // Predicated region
    $region10: #{tpu_custom_call.1} parent=1 // pred_check
      _
    $region11: #{tpu_custom_call.1} parent=1 // pred_check_branch
      %38 = sbr.rel (0) target = $region13
    $region12: #{tpu_custom_call.1} parent=1 // pred_region
      _
    $region13: #{tpu_custom_call.1} parent=1 // pred_fallthru
      _
    // Predicated region
    $region14: #{tpu_custom_call.1} parent=1 // pred_check
      _
    $region15: #{tpu_custom_call.1} parent=1 // pred_check_branch
      %40 = sbr.rel (0) target = $region17
    $region16: #{tpu_custom_call.1} parent=1 // pred_region
      %s42 = ssub.s32 6912, 6912
      %43 = vsyncadd [#allocation8], %s42
      %s44 = sshll.u32 [#allocation9], 4
      %s45 = int_to_ptr.vmem [resolvable:$true] %s44
      %50 = dma.hbm_to_vmem [thread:$0]  %s3, 6912, %s45, [#allocation8], 128, 128, 8
    $region17: #{tpu_custom_call.1} parent=1 // pred_fallthru
      _
    // Predicated region
    $region18: #{tpu_custom_call.1} parent=1 // pred_check
      _
    $region19: #{tpu_custom_call.1} parent=1 // pred_check_branch
      %52 = sbr.rel (0) target = $region21
    $region20: #{tpu_custom_call.1} parent=1 // pred_region
      _
    $region21: #{tpu_custom_call.1} parent=1 // pred_fallthru
      _
    // Predicated region
    $region22: #{tpu_custom_call.1} parent=1 // pred_check
      _
    $region23: #{tpu_custom_call.1} parent=1 // pred_check_branch
      %54 = sbr.rel (0) target = $region25
    $region24: #{tpu_custom_call.1} parent=1 // pred_region
      %55 = dma.done [#allocation5], 512
    $region25: #{tpu_custom_call.1} parent=1 // pred_fallthru
      _
    // Predicated region
    $region26: #{tpu_custom_call.1} parent=1 // pred_check
      _
    $region27: #{tpu_custom_call.1} parent=1 // pred_check_branch
      %57 = sbr.rel (0) target = $region29
    $region28: #{tpu_custom_call.1} parent=1 // pred_region
      %58 = dma.done [#allocation8], 6912
    $region29: #{tpu_custom_call.1} parent=1 // pred_fallthru
      _
    // Predicated region
    $region30: #{tpu_custom_call.1} parent=1 // pred_check
      _
    $region31: #{tpu_custom_call.1} parent=1 // pred_check_branch
      %60 = sbr.rel (0) target = $region33
    $region32: #{tpu_custom_call.1} parent=1 // pred_region
      %61 = dma.done [#allocation8], 6912
    $region33: #{tpu_custom_call.1} parent=1 // pred_fallthru
      _
    %62 = vst [vmem:[#allocation2] sm:$0xff] 0.0
    %vm63 = vcmask 130048
    %64 = vst.msk [vmem:[#allocation2 + $0x8] sm:$0xff] %vm63, 0.0
    %65 = vst [vmem:[#allocation2 + $0x10] sm:$0xff] 0.0
    %66 = vst.msk [vmem:[#allocation2 + $0x18] sm:$0xff] %vm63, 0.0
    %67 = vst [vmem:[#allocation2 + $0x20] sm:$0xff] 0.0
    %68 = vst.msk [vmem:[#allocation2 + $0x28] sm:$0xff] %vm63, 0.0
    %69 = vst [vmem:[#allocation2 + $0x30] sm:$0xff] 0.0
    %70 = vst.msk [vmem:[#allocation2 + $0x38] sm:$0xff] %vm63, 0.0
    %71 = vst [vmem:[#allocation2 + $0x40] sm:$0xf] 0.0
    %vm72 = vcmask 125952
    %73 = vst.msk [vmem:[#allocation2 + $0x48] sm:$0xf] %vm72, 0.0
    %74 = vst [vmem:[#allocation3] sm:$0xff] 0.0
    %75 = vst.msk [vmem:[#allocation3 + $0x8] sm:$0xff] %vm63, 0.0
    %76 = vst [vmem:[#allocation3 + $0x10] sm:$0xff] 0.0
    %77 = vst.msk [vmem:[#allocation3 + $0x18] sm:$0xff] %vm63, 0.0
    %78 = vst [vmem:[#allocation3 + $0x20] sm:$0xff] 0.0
    %79 = vst.msk [vmem:[#allocation3 + $0x28] sm:$0xff] %vm63, 0.0
    %80 = vst [vmem:[#allocation3 + $0x30] sm:$0xff] 0.0
    %81 = vst.msk [vmem:[#allocation3 + $0x38] sm:$0xff] %vm63, 0.0
    %82 = vst [vmem:[#allocation3 + $0x40] sm:$0xf] 0.0
    %83 = vst.msk [vmem:[#allocation3 + $0x48] sm:$0xf] %vm72, 0.0
    %v84 = vld [vmem:[#allocation4] sm:$0xff]
    %v85 = vld [vmem:[#allocation4 + $0x8] sm:$0xff]
    %s86 = scalar_lea.vmem [#allocation4], 16
    %v87 = vld [vmem:[%s86] sm:$0xff]
    %v88 = vld [vmem:[%s86 + $0x8] sm:$0xff]
    %vm91 = vcmask 1040384
    %v92 = vrot.slane %v84, 7
    %v93 = vrot.slane %v85, 7
    %v94 = vsel %vm91, %v92, %v93
    %95 = vrot.lane.b32.xlu0 %v92, 8
    %v96 = vpop.permute.xlu0 %95
    %97 = vrot.lane.b32.xlu0 %v94, 8
    %v98 = vpop.permute.xlu0 %97
    %99 = vrot.lane.b32.xlu0 %v93, 8
    %v100 = vpop.permute.xlu0 %99
    %vm104 = vcmask 1047617
    %105 = vst.msk [vmem:[#allocation2] sm:$0xfe] %vm104, %v96
    %vm106 = vcmask 64513
    %107 = vst.msk [vmem:[#allocation2 + $0x8] sm:$0xfe] %vm106, %v96
    %vm108 = vcmask 1047616
    %109 = vst.msk [vmem:[#allocation2 + $0x10] sm:$0xff] %vm108, %v98
    %vm110 = vcmask 64512
    %111 = vst.msk [vmem:[#allocation2 + $0x18] sm:$0xff] %vm110, %v98
    %vm112 = vcmask 1040448
    %113 = vst.msk [vmem:[#allocation2 + $0x20] sm:$0x1] %vm112, %v100
    %vm114 = vcmask 57344
    %115 = vst.msk [vmem:[#allocation2 + $0x28] sm:$0x1] %vm114, %v100
    %vm118 = vcmask 1042432
    %v119 = vrot.slane %v87, 5
    %v120 = vrot.slane %v88, 5
    %v121 = vsel %vm118, %v119, %v120
    %122 = vrot.lane.b32.xlu0 %v119, 8
    %v123 = vpop.permute.xlu0 %122
    %124 = vrot.lane.b32.xlu0 %v121, 8
    %v125 = vpop.permute.xlu0 %124
    %126 = vrot.lane.b32.xlu0 %v120, 8
    %v127 = vpop.permute.xlu0 %126
    %vm131 = vcmask 1047619
    %132 = vst.msk [vmem:[#allocation2 + $0x20] sm:$0xf8] %vm131, %v123
    %vm133 = vcmask 64515
    %134 = vst.msk [vmem:[#allocation2 + $0x28] sm:$0xf8] %vm133, %v123
    %135 = vst.msk [vmem:[#allocation2 + $0x30] sm:$0xff] %vm108, %v125
    %136 = vst.msk [vmem:[#allocation2 + $0x38] sm:$0xff] %vm110, %v125
    %vm137 = vcmask 1042496
    %138 = vst.msk [vmem:[#allocation2 + $0x40] sm:$0x7] %vm137, %v127
    %vm139 = vcmask 59392
    %140 = vst.msk [vmem:[#allocation2 + $0x48] sm:$0x7] %vm139, %v127
    %v141 = vld [vmem:[#allocation2] sm:$0xff]
    %v142 = vld [vmem:[#allocation2 + $0x8] sm:$0xff]
    %v143 = vld [vmem:[#allocation2 + $0x10] sm:$0xff]
    %v144 = vld [vmem:[#allocation2 + $0x18] sm:$0xff]
    %v145 = vld [vmem:[#allocation2 + $0x20] sm:$0xff]
    %v146 = vld [vmem:[#allocation2 + $0x28] sm:$0xff]
    %v147 = vld [vmem:[#allocation2 + $0x30] sm:$0xff]
    %v148 = vld [vmem:[#allocation2 + $0x38] sm:$0xff]
    %v149 = vld [vmem:[#allocation2 + $0x40] sm:$0x3]
    %v150 = vld [vmem:[#allocation2 + $0x48] sm:$0x3]
    %v151 = vld [vmem:[#allocation7] sm:$0xff]
    %v152 = vld [vmem:[#allocation7 + $0x8] sm:$0xff]
    %v153 = vld [vmem:[#allocation7 + $0x10] sm:$0xff]
    %v154 = vld [vmem:[#allocation7 + $0x18] sm:$0xff]
    %v155 = vld [vmem:[#allocation7 + $0x20] sm:$0xff]
    %v156 = vld [vmem:[#allocation7 + $0x28] sm:$0xff]
    %v157 = vld [vmem:[#allocation7 + $0x30] sm:$0xff]
    %v158 = vld [vmem:[#allocation7 + $0x38] sm:$0xff]
    %v159 = vld [vmem:[#allocation7 + $0x40] sm:$0xff]
    %v160 = vld [vmem:[#allocation7 + $0x48] sm:$0xff]
    %v161 = vld [vmem:[#allocation7 + $0x50] sm:$0xff]
    %v162 = vld [vmem:[#allocation7 + $0x58] sm:$0xff]
    %v163 = vld [vmem:[#allocation7 + $0x60] sm:$0xff]
    %v164 = vld [vmem:[#allocation7 + $0x68] sm:$0xff]
    %v165 = vld [vmem:[#allocation7 + $0x70] sm:$0xff]
    %v166 = vld [vmem:[#allocation7 + $0x78] sm:$0xff]
    %v167 = vld [vmem:[#allocation7 + $0x80] sm:$0xff]
    %v168 = vld [vmem:[#allocation7 + $0x88] sm:$0xff]
    %v169 = vld [vmem:[#allocation2] sm:$0xfe]
    %v170 = vld [vmem:[#allocation2 + $0x8] sm:$0xfe]
    %v171 = vld [vmem:[#allocation2 + $0x40] sm:$0x7]
    %v172 = vld [vmem:[#allocation2 + $0x48] sm:$0x7]
    %s173 = scalar_lea.vmem [#allocation7], 144
    %v174 = vld [vmem:[%s173] sm:$0xff]
    %v175 = vld [vmem:[%s173 + $0x8] sm:$0xff]
    %v176 = vld [vmem:[%s173 + $0x10] sm:$0xff]
    %v177 = vld [vmem:[%s173 + $0x18] sm:$0xff]
    %v178 = vld [vmem:[%s173 + $0x20] sm:$0xff]
    %v179 = vld [vmem:[%s173 + $0x28] sm:$0xff]
    %v180 = vld [vmem:[%s173 + $0x30] sm:$0xff]
    %v181 = vld [vmem:[%s173 + $0x38] sm:$0xff]
    %v182 = vld [vmem:[%s173 + $0x40] sm:$0xff]
    %v183 = vld [vmem:[%s173 + $0x48] sm:$0xff]
    %v184 = vld [vmem:[%s173 + $0x50] sm:$0xff]
    %v185 = vld [vmem:[%s173 + $0x58] sm:$0xff]
    %v186 = vld [vmem:[%s173 + $0x60] sm:$0xff]
    %v187 = vld [vmem:[%s173 + $0x68] sm:$0xff]
    %v188 = vld [vmem:[%s173 + $0x70] sm:$0xff]
    %v189 = vld [vmem:[%s173 + $0x78] sm:$0xff]
    %v190 = vld [vmem:[%s173 + $0x80] sm:$0xff]
    %v191 = vld [vmem:[%s173 + $0x88] sm:$0xff]
    %vm202 = vcmask 1046528
    %v203 = vrot.slane %v169, 1
    %v204 = vrot.slane %v143, 1
    %v205 = vsel %vm202, %v203, %v204
    %v206 = vrot.slane %v170, 1
    %v207 = vrot.slane %v144, 1
    %v208 = vsel %vm202, %v206, %v207
    %v209 = vrot.slane %v145, 1
    %v210 = vsel %vm202, %v204, %v209
    %v211 = vrot.slane %v146, 1
    %v212 = vsel %vm202, %v207, %v211
    %v213 = vrot.slane %v147, 1
    %v214 = vsel %vm202, %v209, %v213
    %v215 = vrot.slane %v148, 1
    %v216 = vsel %vm202, %v211, %v215
    %v217 = vrot.slane %v171, 1
    %v218 = vsel %vm202, %v213, %v217
    %v219 = vrot.slane %v172, 1
    %v220 = vsel %vm202, %v215, %v219
    %v226 = vsel %vm63, %v208, 0
    %v228 = vsel %vm63, %v212, 0
    %v230 = vsel %vm63, %v216, 0
    %v232 = vsel %vm63, %v220, 0
    %v234 = vsel %vm63, %v219, 0
    %236 = vmatprep.subr.mxu0 0.0
    %237 = vmatpush1.msra.mxu0 %v189
    %238 = vmatprep.subr.mxu0 0.0
    %239 = vmatpush1.msra.mxu0 %v188
    %240 = vmatprep.subr.mxu0 0.0
    %241 = vmatpush1.msra.mxu0 %v187
    %242 = vmatprep.subr.mxu0 0.0
    %243 = vmatpush1.msra.mxu0 %v186
    %244 = vmatprep.subr.mxu0 0.0
    %245 = vmatpush1.msra.mxu0 %v185
    %246 = vmatprep.subr.mxu0 0.0
    %247 = vmatpush1.msra.mxu0 %v184
    %248 = vmatprep.subr.mxu0 0.0
    %249 = vmatpush1.msra.mxu0 %v183
    %250 = vmatprep.subr.mxu0 0.0
    %251 = vmatpush1.msra.mxu0 %v182
    %252 = vmatprep.subr.mxu0 0.0
    %253 = vmatpush1.msra.mxu0 %v181
    %254 = vmatprep.subr.mxu0 0.0
    %255 = vmatpush1.msra.mxu0 %v180
    %256 = vmatprep.subr.mxu0 0.0
    %257 = vmatpush1.msra.mxu0 %v179
    %258 = vmatprep.subr.mxu0 0.0
    %259 = vmatpush1.msra.mxu0 %v178
    %260 = vmatprep.subr.mxu0 0.0
    %261 = vmatpush1.msra.mxu0 %v177
    %262 = vmatprep.subr.mxu0 0.0
    %263 = vmatpush1.msra.mxu0 %v176
    %264 = vmatprep.subr.mxu0 0.0
    %265 = vmatpush1.msra.mxu0 %v175
    %266 = vmatprep.subr.mxu0 0.0
    %267 = vmatpush1.msra.mxu0 %v174
    %268 = vmatprep.subr.mxu0 0.0
    %269 = vmatpush2.msra.mxu0 0.0
    %270 = vmatprep.subr.mxu0 0.0
    %271 = vmatpush2.msra.mxu0 0.0
    %272 = vmatprep.subr.mxu0 0.0
    %273 = vmatpush2.msra.mxu0 0.0
    %274 = vmatprep.subr.mxu0 0.0
    %275 = vmatpush2.msra.mxu0 0.0
    %276 = vmatprep.subr.mxu0 0.0
    %277 = vmatpush2.msra.mxu0 0.0
    %278 = vmatprep.subr.mxu0 0.0
    %279 = vmatpush2.msra.mxu0 0.0
    %280 = vmatprep.subr.mxu0 0.0
    %281 = vmatpush2.msra.mxu0 0.0
    %282 = vmatprep.subr.mxu0 0.0
    %283 = vmatpush2.msra.mxu0 0.0
    %284 = vmatprep.subr.mxu0 0.0
    %285 = vmatpush2.msra.mxu0 0.0
    %286 = vmatprep.subr.mxu0 0.0
    %287 = vmatpush2.msra.mxu0 0.0
    %288 = vmatprep.subr.mxu0 0.0
    %289 = vmatpush2.msra.mxu0 0.0
    %290 = vmatprep.subr.mxu0 0.0
    %291 = vmatpush2.msra.mxu0 0.0
    %292 = vmatprep.subr.mxu0 0.0
    %293 = vmatpush2.msra.mxu0 0.0
    %294 = vmatprep.subr.mxu0 0.0
    %295 = vmatpush2.msra.mxu0 0.0
    %296 = vmatprep.subr.mxu0 0.0
    %297 = vmatpush2.msra.mxu0 %v191
    %298 = vmatprep.subr.mxu0 0.0
    %299 = vmatpush2.msra.mxu0 %v190
    %300 = vmatprep.mubr.f32.mxu0 %v226
    %301 = vmatmul.mubr.f32.gmra.mxu0 %v205
    %v302 = vpop.f32.mrf.mxu0
    %v303 = vadd.f32 0.0, %v302
    %v304 = vpop.f32.mrf.mxu0
    %305 = vmatprep.mubr.f32.mxu0 %v228
    %306 = vmatmul.mubr.f32.gmra.mxu0 %v210
    %v307 = vpop.f32.mrf.mxu0
    %v308 = vadd.f32 0.0, %v307
    %v309 = vpop.f32.mrf.mxu0
    %310 = vmatprep.mubr.f32.mxu0 %v230
    %311 = vmatmul.mubr.f32.gmra.mxu0 %v214
    %v312 = vpop.f32.mrf.mxu0
    %v313 = vadd.f32 0.0, %v312
    %v314 = vpop.f32.mrf.mxu0
    %315 = vmatprep.mubr.f32.mxu0 %v232
    %316 = vmatmul.mubr.f32.gmra.mxu0 %v218
    %v317 = vpop.f32.mrf.mxu0
    %v318 = vadd.f32 0.0, %v317
    %v319 = vpop.f32.mrf.mxu0
    %320 = vmatprep.mubr.f32.mxu0 %v234
    %321 = vmatmul.mubr.f32.gmra.mxu0 %v217
    %v322 = vpop.f32.mrf.mxu0
    %v323 = vadd.f32 0.0, %v322
    %v324 = vpop.f32.mrf.mxu0
    %325 = vdwg.mxu0
    %v327 = vsel %vm63, %v142, 0
    %v329 = vsel %vm63, %v144, 0
    %v331 = vsel %vm63, %v146, 0
    %v333 = vsel %vm63, %v148, 0
    %v336 = vsel %vm63, %v150, 0
    %338 = vmatprep.subr.mxu0 0.0
    %339 = vmatpush1.msra.mxu0 %v166
    %340 = vmatprep.subr.mxu0 0.0
    %341 = vmatpush1.msra.mxu0 %v165
    %342 = vmatprep.subr.mxu0 0.0
    %343 = vmatpush1.msra.mxu0 %v164
    %344 = vmatprep.subr.mxu0 0.0
    %345 = vmatpush1.msra.mxu0 %v163
    %346 = vmatprep.subr.mxu0 0.0
    %347 = vmatpush1.msra.mxu0 %v162
    %348 = vmatprep.subr.mxu0 0.0
    %349 = vmatpush1.msra.mxu0 %v161
    %350 = vmatprep.subr.mxu0 0.0
    %351 = vmatpush1.msra.mxu0 %v160
    %352 = vmatprep.subr.mxu0 0.0
    %353 = vmatpush1.msra.mxu0 %v159
    %354 = vmatprep.subr.mxu0 0.0
    %355 = vmatpush1.msra.mxu0 %v158
    %356 = vmatprep.subr.mxu0 0.0
    %357 = vmatpush1.msra.mxu0 %v157
    %358 = vmatprep.subr.mxu0 0.0
    %359 = vmatpush1.msra.mxu0 %v156
    %360 = vmatprep.subr.mxu0 0.0
    %361 = vmatpush1.msra.mxu0 %v155
    %362 = vmatprep.subr.mxu0 0.0
    %363 = vmatpush1.msra.mxu0 %v154
    %364 = vmatprep.subr.mxu0 0.0
    %365 = vmatpush1.msra.mxu0 %v153
    %366 = vmatprep.subr.mxu0 0.0
    %367 = vmatpush1.msra.mxu0 %v152
    %368 = vmatprep.subr.mxu0 0.0
    %369 = vmatpush1.msra.mxu0 %v151
    %370 = vmatprep.subr.mxu0 0.0
    %371 = vmatpush2.msra.mxu0 0.0
    %372 = vmatprep.subr.mxu0 0.0
    %373 = vmatpush2.msra.mxu0 0.0
    %374 = vmatprep.subr.mxu0 0.0
    %375 = vmatpush2.msra.mxu0 0.0
    %376 = vmatprep.subr.mxu0 0.0
    %377 = vmatpush2.msra.mxu0 0.0
    %378 = vmatprep.subr.mxu0 0.0
    %379 = vmatpush2.msra.mxu0 0.0
    %380 = vmatprep.subr.mxu0 0.0
    %381 = vmatpush2.msra.mxu0 0.0
    %382 = vmatprep.subr.mxu0 0.0
    %383 = vmatpush2.msra.mxu0 0.0
    %384 = vmatprep.subr.mxu0 0.0
    %385 = vmatpush2.msra.mxu0 0.0
    %386 = vmatprep.subr.mxu0 0.0
    %387 = vmatpush2.msra.mxu0 0.0
    %388 = vmatprep.subr.mxu0 0.0
    %389 = vmatpush2.msra.mxu0 0.0
    %390 = vmatprep.subr.mxu0 0.0
    %391 = vmatpush2.msra.mxu0 0.0
    %392 = vmatprep.subr.mxu0 0.0
    %393 = vmatpush2.msra.mxu0 0.0
    %394 = vmatprep.subr.mxu0 0.0
    %395 = vmatpush2.msra.mxu0 0.0
    %396 = vmatprep.subr.mxu0 0.0
    %397 = vmatpush2.msra.mxu0 0.0
    %398 = vmatprep.subr.mxu0 0.0
    %399 = vmatpush2.msra.mxu0 %v168
    %400 = vmatprep.subr.mxu0 0.0
    %401 = vmatpush2.msra.mxu0 %v167
    %402 = vmatprep.mubr.f32.mxu0 %v327
    %403 = vmatmul.mubr.f32.gmra.mxu0 %v141
    %v404 = vpop.f32.mrf.mxu0
    %v405 = vadd.f32 %v303, %v404
    %v406 = vpop.f32.mrf.mxu0
    %407 = vmatprep.mubr.f32.mxu0 %v329
    %408 = vmatmul.mubr.f32.gmra.mxu0 %v143
    %v409 = vpop.f32.mrf.mxu0
    %v410 = vadd.f32 %v308, %v409
    %v411 = vpop.f32.mrf.mxu0
    %412 = vmatprep.mubr.f32.mxu0 %v331
    %413 = vmatmul.mubr.f32.gmra.mxu0 %v145
    %v414 = vpop.f32.mrf.mxu0
    %v415 = vadd.f32 %v313, %v414
    %v416 = vpop.f32.mrf.mxu0
    %417 = vmatprep.mubr.f32.mxu0 %v333
    %418 = vmatmul.mubr.f32.gmra.mxu0 %v147
    %v419 = vpop.f32.mrf.mxu0
    %v420 = vadd.f32 %v318, %v419
    %v421 = vpop.f32.mrf.mxu0
    %422 = vmatprep.mubr.f32.mxu0 %v336
    %423 = vmatmul.mubr.f32.gmra.mxu0 %v149
    %v424 = vpop.f32.mrf.mxu0
    %v425 = vadd.f32 %v323, %v424
    %v426 = vpop.f32.mrf.mxu0
    %427 = vdwg.mxu0
    %v428 = vld [vmem:[#allocation2] sm:$0xfc]
    %v429 = vld [vmem:[#allocation2 + $0x8] sm:$0xfc]
    %v430 = vld [vmem:[#allocation2 + $0x40] sm:$0xf]
    %v431 = vld [vmem:[#allocation2 + $0x48] sm:$0xf]
    %s432 = scalar_lea.vmem [#allocation7], 288
    %v433 = vld [vmem:[%s432] sm:$0xff]
    %v434 = vld [vmem:[%s432 + $0x8] sm:$0xff]
    %v435 = vld [vmem:[%s432 + $0x10] sm:$0xff]
    %v436 = vld [vmem:[%s432 + $0x18] sm:$0xff]
    %v437 = vld [vmem:[%s432 + $0x20] sm:$0xff]
    %v438 = vld [vmem:[%s432 + $0x28] sm:$0xff]
    %v439 = vld [vmem:[%s432 + $0x30] sm:$0xff]
    %v440 = vld [vmem:[%s432 + $0x38] sm:$0xff]
    %v441 = vld [vmem:[%s432 + $0x40] sm:$0xff]
    %v442 = vld [vmem:[%s432 + $0x48] sm:$0xff]
    %v443 = vld [vmem:[%s432 + $0x50] sm:$0xff]
    %v444 = vld [vmem:[%s432 + $0x58] sm:$0xff]
    %v445 = vld [vmem:[%s432 + $0x60] sm:$0xff]
    %v446 = vld [vmem:[%s432 + $0x68] sm:$0xff]
    %v447 = vld [vmem:[%s432 + $0x70] sm:$0xff]
    %v448 = vld [vmem:[%s432 + $0x78] sm:$0xff]
    %v449 = vld [vmem:[%s432 + $0x80] sm:$0xff]
    %v450 = vld [vmem:[%s432 + $0x88] sm:$0xff]
    %vm455 = vcmask 1045504
    %v456 = vrot.slane %v428, 2
    %v457 = vrot.slane %v143, 2
    %v458 = vsel %vm455, %v456, %v457
    %v459 = vrot.slane %v429, 2
    %v460 = vrot.slane %v144, 2
    %v461 = vsel %vm455, %v459, %v460
    %v462 = vrot.slane %v145, 2
    %v463 = vsel %vm455, %v457, %v462
    %v464 = vrot.slane %v146, 2
    %v465 = vsel %vm455, %v460, %v464
    %v466 = vrot.slane %v147, 2
    %v467 = vsel %vm455, %v462, %v466
    %v468 = vrot.slane %v148, 2
    %v469 = vsel %vm455, %v464, %v468
    %v470 = vrot.slane %v430, 2
    %v471 = vsel %vm455, %v466, %v470
    %v472 = vrot.slane %v431, 2
    %v473 = vsel %vm455, %v468, %v472
    %v479 = vsel %vm63, %v461, 0
    %v481 = vsel %vm63, %v465, 0
    %v483 = vsel %vm63, %v469, 0
    %v485 = vsel %vm63, %v473, 0
    %v487 = vsel %vm63, %v472, 0
    %489 = vmatprep.subr.mxu0 0.0
    %490 = vmatpush1.msra.mxu0 %v448
    %491 = vmatprep.subr.mxu0 0.0
    %492 = vmatpush1.msra.mxu0 %v447
    %493 = vmatprep.subr.mxu0 0.0
    %494 = vmatpush1.msra.mxu0 %v446
    %495 = vmatprep.subr.mxu0 0.0
    %496 = vmatpush1.msra.mxu0 %v445
    %497 = vmatprep.subr.mxu0 0.0
    %498 = vmatpush1.msra.mxu0 %v444
    %499 = vmatprep.subr.mxu0 0.0
    %500 = vmatpush1.msra.mxu0 %v443
    %501 = vmatprep.subr.mxu0 0.0
    %502 = vmatpush1.msra.mxu0 %v442
    %503 = vmatprep.subr.mxu0 0.0
    %504 = vmatpush1.msra.mxu0 %v441
    %505 = vmatprep.subr.mxu0 0.0
    %506 = vmatpush1.msra.mxu0 %v440
    %507 = vmatprep.subr.mxu0 0.0
    %508 = vmatpush1.msra.mxu0 %v439
    %509 = vmatprep.subr.mxu0 0.0
    %510 = vmatpush1.msra.mxu0 %v438
    %511 = vmatprep.subr.mxu0 0.0
    %512 = vmatpush1.msra.mxu0 %v437
    %513 = vmatprep.subr.mxu0 0.0
    %514 = vmatpush1.msra.mxu0 %v436
    %515 = vmatprep.subr.mxu0 0.0
    %516 = vmatpush1.msra.mxu0 %v435
    %517 = vmatprep.subr.mxu0 0.0
    %518 = vmatpush1.msra.mxu0 %v434
    %519 = vmatprep.subr.mxu0 0.0
    %520 = vmatpush1.msra.mxu0 %v433
    %521 = vmatprep.subr.mxu0 0.0
    %522 = vmatpush2.msra.mxu0 0.0
    %523 = vmatprep.subr.mxu0 0.0
    %524 = vmatpush2.msra.mxu0 0.0
    %525 = vmatprep.subr.mxu0 0.0
    %526 = vmatpush2.msra.mxu0 0.0
    %527 = vmatprep.subr.mxu0 0.0
    %528 = vmatpush2.msra.mxu0 0.0
    %529 = vmatprep.subr.mxu0 0.0
    %530 = vmatpush2.msra.mxu0 0.0
    %531 = vmatprep.subr.mxu0 0.0
    %532 = vmatpush2.msra.mxu0 0.0
    %533 = vmatprep.subr.mxu0 0.0
    %534 = vmatpush2.msra.mxu0 0.0
    %535 = vmatprep.subr.mxu0 0.0
    %536 = vmatpush2.msra.mxu0 0.0
    %537 = vmatprep.subr.mxu0 0.0
    %538 = vmatpush2.msra.mxu0 0.0
    %539 = vmatprep.subr.mxu0 0.0
    %540 = vmatpush2.msra.mxu0 0.0
    %541 = vmatprep.subr.mxu0 0.0
    %542 = vmatpush2.msra.mxu0 0.0
    %543 = vmatprep.subr.mxu0 0.0
    %544 = vmatpush2.msra.mxu0 0.0
    %545 = vmatprep.subr.mxu0 0.0
    %546 = vmatpush2.msra.mxu0 0.0
    %547 = vmatprep.subr.mxu0 0.0
    %548 = vmatpush2.msra.mxu0 0.0
    %549 = vmatprep.subr.mxu0 0.0
    %550 = vmatpush2.msra.mxu0 %v450
    %551 = vmatprep.subr.mxu0 0.0
    %552 = vmatpush2.msra.mxu0 %v449
    %553 = vmatprep.mubr.f32.mxu0 %v479
    %554 = vmatmul.mubr.f32.gmra.mxu0 %v458
    %v555 = vpop.f32.mrf.mxu0
    %v556 = vadd.f32 0.0, %v555
    %v557 = vpop.f32.mrf.mxu0
    %558 = vmatprep.mubr.f32.mxu0 %v481
    %559 = vmatmul.mubr.f32.gmra.mxu0 %v463
    %v560 = vpop.f32.mrf.mxu0
    %v561 = vadd.f32 0.0, %v560
    %v562 = vpop.f32.mrf.mxu0
    %563 = vmatprep.mubr.f32.mxu0 %v483
    %564 = vmatmul.mubr.f32.gmra.mxu0 %v467
    %v565 = vpop.f32.mrf.mxu0
    %v566 = vadd.f32 0.0, %v565
    %v567 = vpop.f32.mrf.mxu0
    %568 = vmatprep.mubr.f32.mxu0 %v485
    %569 = vmatmul.mubr.f32.gmra.mxu0 %v471
    %v570 = vpop.f32.mrf.mxu0
    %v571 = vadd.f32 0.0, %v570
    %v572 = vpop.f32.mrf.mxu0
    %573 = vmatprep.mubr.f32.mxu0 %v487
    %574 = vmatmul.mubr.f32.gmra.mxu0 %v470
    %v575 = vpop.f32.mrf.mxu0
    %v576 = vadd.f32 0.0, %v575
    %v577 = vpop.f32.mrf.mxu0
    %578 = vdwg.mxu0
    %v579 = vadd.f32 %v405, %v556
    %v580 = vadd.f32 %v410, %v561
    %v581 = vadd.f32 %v415, %v566
    %v582 = vadd.f32 %v420, %v571
    %v583 = vadd.f32 %v425, %v576
    %v584 = vld [vmem:[%s2] sm:$0x1]
    %v586 = vlaneseq
    %v587 = vshrl.u32 %v586, 7
    %v588 = vsub.s32 0, %v587
    %v589 = vrot.slane %v584, %v588
    %v591 = vadd.f32 %v579, %v589
    %v592 = vadd.f32 %v580, %v589
    %v593 = vadd.f32 %v581, %v589
    %v594 = vadd.f32 %v582, %v589
    %v595 = vadd.f32 %v583, %v589
    %v596 = vmax.f32 %v591, 0.0
    %v597 = vmax.f32 %v592, 0.0
    %v600 = vrot.slane %v596, 7
    %v601 = vrot.slane %v597, 7
    %v602 = vsel %vm91, %v600, %v601
    %603 = vrot.lane.b32.xlu0 %v600, 8
    %v604 = vpop.permute.xlu0 %603
    %605 = vrot.lane.b32.xlu0 %v602, 8
    %v606 = vpop.permute.xlu0 %605
    %607 = vrot.lane.b32.xlu0 %v601, 8
    %v608 = vpop.permute.xlu0 %607
    %612 = vst.msk [vmem:[#allocation3] sm:$0xfe] %vm104, %v604
    %613 = vst.msk [vmem:[#allocation3 + $0x8] sm:$0xfe] %vm106, %v604
    %614 = vst.msk [vmem:[#allocation3 + $0x10] sm:$0xff] %vm108, %v606
    %615 = vst.msk [vmem:[#allocation3 + $0x18] sm:$0xff] %vm110, %v606
    %616 = vst.msk [vmem:[#allocation3 + $0x20] sm:$0x1] %vm112, %v608
    %617 = vst.msk [vmem:[#allocation3 + $0x28] sm:$0x1] %vm114, %v608
    %v618 = vmax.f32 %v593, 0.0
    %v619 = vmax.f32 %v594, 0.0
    %v620 = vmax.f32 %v595, 0.0
    %v624 = vrot.slane %v618, 7
    %v625 = vrot.slane %v619, 7
    %v626 = vsel %vm91, %v624, %v625
    %v627 = vrot.slane %v620, 7
    %v628 = vsel %vm91, %v625, %v627
    %629 = vrot.lane.b32.xlu0 %v624, 8
    %v630 = vpop.permute.xlu0 %629
    %631 = vrot.lane.b32.xlu0 %v626, 8
    %v632 = vpop.permute.xlu0 %631
    %633 = vrot.lane.b32.xlu0 %v628, 8
    %v634 = vpop.permute.xlu0 %633
    %638 = vst.msk [vmem:[#allocation3 + $0x20] sm:$0xf8] %vm131, %v630
    %639 = vst.msk [vmem:[#allocation3 + $0x28] sm:$0xf8] %vm133, %v630
    %640 = vst.msk [vmem:[#allocation3 + $0x30] sm:$0xff] %vm108, %v632
    %641 = vst.msk [vmem:[#allocation3 + $0x38] sm:$0xff] %vm110, %v632
    %642 = vst.msk [vmem:[#allocation3 + $0x40] sm:$0x7] %vm137, %v634
    %643 = vst.msk [vmem:[#allocation3 + $0x48] sm:$0x7] %vm139, %v634
    %v644 = vld [vmem:[#allocation3] sm:$0xff]
    %v645 = vld [vmem:[#allocation3 + $0x8] sm:$0xff]
    %v646 = vld [vmem:[#allocation3 + $0x10] sm:$0xff]
    %v647 = vld [vmem:[#allocation3 + $0x18] sm:$0xff]
    %v648 = vld [vmem:[#allocation3 + $0x20] sm:$0xff]
    %v649 = vld [vmem:[#allocation3 + $0x28] sm:$0xff]
    %v650 = vld [vmem:[#allocation3 + $0x30] sm:$0xff]
    %v651 = vld [vmem:[#allocation3 + $0x38] sm:$0xff]
    %v652 = vld [vmem:[#allocation3 + $0x40] sm:$0x3]
    %v653 = vld [vmem:[#allocation3 + $0x48] sm:$0x3]
    %v654 = vld [vmem:[#allocation9] sm:$0xff]
    %v655 = vld [vmem:[#allocation9 + $0x8] sm:$0xff]
    %v656 = vld [vmem:[#allocation9 + $0x10] sm:$0xff]
    %v657 = vld [vmem:[#allocation9 + $0x18] sm:$0xff]
    %v658 = vld [vmem:[#allocation9 + $0x20] sm:$0xff]
    %v659 = vld [vmem:[#allocation9 + $0x28] sm:$0xff]
    %v660 = vld [vmem:[#allocation9 + $0x30] sm:$0xff]
    %v661 = vld [vmem:[#allocation9 + $0x38] sm:$0xff]
    %v662 = vld [vmem:[#allocation9 + $0x40] sm:$0xff]
    %v663 = vld [vmem:[#allocation9 + $0x48] sm:$0xff]
    %v664 = vld [vmem:[#allocation9 + $0x50] sm:$0xff]
    %v665 = vld [vmem:[#allocation9 + $0x58] sm:$0xff]
    %v666 = vld [vmem:[#allocation9 + $0x60] sm:$0xff]
    %v667 = vld [vmem:[#allocation9 + $0x68] sm:$0xff]
    %v668 = vld [vmem:[#allocation9 + $0x70] sm:$0xff]
    %v669 = vld [vmem:[#allocation9 + $0x78] sm:$0xff]
    %v670 = vld [vmem:[#allocation9 + $0x80] sm:$0xff]
    %v671 = vld [vmem:[#allocation9 + $0x88] sm:$0xff]
    %v672 = vld [vmem:[#allocation3] sm:$0xfe]
    %v673 = vld [vmem:[#allocation3 + $0x8] sm:$0xfe]
    %v674 = vld [vmem:[#allocation3 + $0x40] sm:$0x7]
    %v675 = vld [vmem:[#allocation3 + $0x48] sm:$0x7]
    %s676 = scalar_lea.vmem [#allocation9], 144
    %v677 = vld [vmem:[%s676] sm:$0xff]
    %v678 = vld [vmem:[%s676 + $0x8] sm:$0xff]
    %v679 = vld [vmem:[%s676 + $0x10] sm:$0xff]
    %v680 = vld [vmem:[%s676 + $0x18] sm:$0xff]
    %v681 = vld [vmem:[%s676 + $0x20] sm:$0xff]
    %v682 = vld [vmem:[%s676 + $0x28] sm:$0xff]
    %v683 = vld [vmem:[%s676 + $0x30] sm:$0xff]
    %v684 = vld [vmem:[%s676 + $0x38] sm:$0xff]
    %v685 = vld [vmem:[%s676 + $0x40] sm:$0xff]
    %v686 = vld [vmem:[%s676 + $0x48] sm:$0xff]
    %v687 = vld [vmem:[%s676 + $0x50] sm:$0xff]
    %v688 = vld [vmem:[%s676 + $0x58] sm:$0xff]
    %v689 = vld [vmem:[%s676 + $0x60] sm:$0xff]
    %v690 = vld [vmem:[%s676 + $0x68] sm:$0xff]
    %v691 = vld [vmem:[%s676 + $0x70] sm:$0xff]
    %v692 = vld [vmem:[%s676 + $0x78] sm:$0xff]
    %v693 = vld [vmem:[%s676 + $0x80] sm:$0xff]
    %v694 = vld [vmem:[%s676 + $0x88] sm:$0xff]
    %v705 = vrot.slane %v672, 1
    %v706 = vrot.slane %v646, 1
    %v707 = vsel %vm202, %v705, %v706
    %v708 = vrot.slane %v673, 1
    %v709 = vrot.slane %v647, 1
    %v710 = vsel %vm202, %v708, %v709
    %v711 = vrot.slane %v648, 1
    %v712 = vsel %vm202, %v706, %v711
    %v713 = vrot.slane %v649, 1
    %v714 = vsel %vm202, %v709, %v713
    %v715 = vrot.slane %v650, 1
    %v716 = vsel %vm202, %v711, %v715
    %v717 = vrot.slane %v651, 1
    %v718 = vsel %vm202, %v713, %v717
    %v719 = vrot.slane %v674, 1
    %v720 = vsel %vm202, %v715, %v719
    %v721 = vrot.slane %v675, 1
    %v722 = vsel %vm202, %v717, %v721
    %v728 = vsel %vm63, %v710, 0
    %v730 = vsel %vm63, %v714, 0
    %v732 = vsel %vm63, %v718, 0
    %v734 = vsel %vm63, %v722, 0
    %v736 = vsel %vm63, %v721, 0
    %738 = vmatprep.subr.mxu0 0.0
    %739 = vmatpush1.msra.mxu0 %v692
    %740 = vmatprep.subr.mxu0 0.0
    %741 = vmatpush1.msra.mxu0 %v691
    %742 = vmatprep.subr.mxu0 0.0
    %743 = vmatpush1.msra.mxu0 %v690
    %744 = vmatprep.subr.mxu0 0.0
    %745 = vmatpush1.msra.mxu0 %v689
    %746 = vmatprep.subr.mxu0 0.0
    %747 = vmatpush1.msra.mxu0 %v688
    %748 = vmatprep.subr.mxu0 0.0
    %749 = vmatpush1.msra.mxu0 %v687
    %750 = vmatprep.subr.mxu0 0.0
    %751 = vmatpush1.msra.mxu0 %v686
    %752 = vmatprep.subr.mxu0 0.0
    %753 = vmatpush1.msra.mxu0 %v685
    %754 = vmatprep.subr.mxu0 0.0
    %755 = vmatpush1.msra.mxu0 %v684
    %756 = vmatprep.subr.mxu0 0.0
    %757 = vmatpush1.msra.mxu0 %v683
    %758 = vmatprep.subr.mxu0 0.0
    %759 = vmatpush1.msra.mxu0 %v682
    %760 = vmatprep.subr.mxu0 0.0
    %761 = vmatpush1.msra.mxu0 %v681
    %762 = vmatprep.subr.mxu0 0.0
    %763 = vmatpush1.msra.mxu0 %v680
    %764 = vmatprep.subr.mxu0 0.0
    %765 = vmatpush1.msra.mxu0 %v679
    %766 = vmatprep.subr.mxu0 0.0
    %767 = vmatpush1.msra.mxu0 %v678
    %768 = vmatprep.subr.mxu0 0.0
    %769 = vmatpush1.msra.mxu0 %v677
    %770 = vmatprep.subr.mxu0 0.0
    %771 = vmatpush2.msra.mxu0 0.0
    %772 = vmatprep.subr.mxu0 0.0
    %773 = vmatpush2.msra.mxu0 0.0
    %774 = vmatprep.subr.mxu0 0.0
    %775 = vmatpush2.msra.mxu0 0.0
    %776 = vmatprep.subr.mxu0 0.0
    %777 = vmatpush2.msra.mxu0 0.0
    %778 = vmatprep.subr.mxu0 0.0
    %779 = vmatpush2.msra.mxu0 0.0
    %780 = vmatprep.subr.mxu0 0.0
    %781 = vmatpush2.msra.mxu0 0.0
    %782 = vmatprep.subr.mxu0 0.0
    %783 = vmatpush2.msra.mxu0 0.0
    %784 = vmatprep.subr.mxu0 0.0
    %785 = vmatpush2.msra.mxu0 0.0
    %786 = vmatprep.subr.mxu0 0.0
    %787 = vmatpush2.msra.mxu0 0.0
    %788 = vmatprep.subr.mxu0 0.0
    %789 = vmatpush2.msra.mxu0 0.0
    %790 = vmatprep.subr.mxu0 0.0
    %791 = vmatpush2.msra.mxu0 0.0
    %792 = vmatprep.subr.mxu0 0.0
    %793 = vmatpush2.msra.mxu0 0.0
    %794 = vmatprep.subr.mxu0 0.0
    %795 = vmatpush2.msra.mxu0 0.0
    %796 = vmatprep.subr.mxu0 0.0
    %797 = vmatpush2.msra.mxu0 0.0
    %798 = vmatprep.subr.mxu0 0.0
    %799 = vmatpush2.msra.mxu0 %v694
    %800 = vmatprep.subr.mxu0 0.0
    %801 = vmatpush2.msra.mxu0 %v693
    %802 = vmatprep.mubr.f32.mxu0 %v728
    %803 = vmatmul.mubr.f32.gmra.mxu0 %v707
    %v804 = vpop.f32.mrf.mxu0
    %v805 = vadd.f32 0.0, %v804
    %v806 = vpop.f32.mrf.mxu0
    %807 = vmatprep.mubr.f32.mxu0 %v730
    %808 = vmatmul.mubr.f32.gmra.mxu0 %v712
    %v809 = vpop.f32.mrf.mxu0
    %v810 = vadd.f32 0.0, %v809
    %v811 = vpop.f32.mrf.mxu0
    %812 = vmatprep.mubr.f32.mxu0 %v732
    %813 = vmatmul.mubr.f32.gmra.mxu0 %v716
    %v814 = vpop.f32.mrf.mxu0
    %v815 = vadd.f32 0.0, %v814
    %v816 = vpop.f32.mrf.mxu0
    %817 = vmatprep.mubr.f32.mxu0 %v734
    %818 = vmatmul.mubr.f32.gmra.mxu0 %v720
    %v819 = vpop.f32.mrf.mxu0
    %v820 = vadd.f32 0.0, %v819
    %v821 = vpop.f32.mrf.mxu0
    %822 = vmatprep.mubr.f32.mxu0 %v736
    %823 = vmatmul.mubr.f32.gmra.mxu0 %v719
    %v824 = vpop.f32.mrf.mxu0
    %v825 = vadd.f32 0.0, %v824
    %v826 = vpop.f32.mrf.mxu0
    %827 = vdwg.mxu0
    %v829 = vsel %vm63, %v645, 0
    %v831 = vsel %vm63, %v647, 0
    %v833 = vsel %vm63, %v649, 0
    %v835 = vsel %vm63, %v651, 0
    %v838 = vsel %vm63, %v653, 0
    %840 = vmatprep.subr.mxu0 0.0
    %841 = vmatpush1.msra.mxu0 %v669
    %842 = vmatprep.subr.mxu0 0.0
    %843 = vmatpush1.msra.mxu0 %v668
    %844 = vmatprep.subr.mxu0 0.0
    %845 = vmatpush1.msra.mxu0 %v667
    %846 = vmatprep.subr.mxu0 0.0
    %847 = vmatpush1.msra.mxu0 %v666
    %848 = vmatprep.subr.mxu0 0.0
    %849 = vmatpush1.msra.mxu0 %v665
    %850 = vmatprep.subr.mxu0 0.0
    %851 = vmatpush1.msra.mxu0 %v664
    %852 = vmatprep.subr.mxu0 0.0
    %853 = vmatpush1.msra.mxu0 %v663
    %854 = vmatprep.subr.mxu0 0.0
    %855 = vmatpush1.msra.mxu0 %v662
    %856 = vmatprep.subr.mxu0 0.0
    %857 = vmatpush1.msra.mxu0 %v661
    %858 = vmatprep.subr.mxu0 0.0
    %859 = vmatpush1.msra.mxu0 %v660
    %860 = vmatprep.subr.mxu0 0.0
    %861 = vmatpush1.msra.mxu0 %v659
    %862 = vmatprep.subr.mxu0 0.0
    %863 = vmatpush1.msra.mxu0 %v658
    %864 = vmatprep.subr.mxu0 0.0
    %865 = vmatpush1.msra.mxu0 %v657
    %866 = vmatprep.subr.mxu0 0.0
    %867 = vmatpush1.msra.mxu0 %v656
    %868 = vmatprep.subr.mxu0 0.0
    %869 = vmatpush1.msra.mxu0 %v655
    %870 = vmatprep.subr.mxu0 0.0
    %871 = vmatpush1.msra.mxu0 %v654
    %872 = vmatprep.subr.mxu0 0.0
    %873 = vmatpush2.msra.mxu0 0.0
    %874 = vmatprep.subr.mxu0 0.0
    %875 = vmatpush2.msra.mxu0 0.0
    %876 = vmatprep.subr.mxu0 0.0
    %877 = vmatpush2.msra.mxu0 0.0
    %878 = vmatprep.subr.mxu0 0.0
    %879 = vmatpush2.msra.mxu0 0.0
    %880 = vmatprep.subr.mxu0 0.0
    %881 = vmatpush2.msra.mxu0 0.0
    %882 = vmatprep.subr.mxu0 0.0
    %883 = vmatpush2.msra.mxu0 0.0
    %884 = vmatprep.subr.mxu0 0.0
    %885 = vmatpush2.msra.mxu0 0.0
    %886 = vmatprep.subr.mxu0 0.0
    %887 = vmatpush2.msra.mxu0 0.0
    %888 = vmatprep.subr.mxu0 0.0
    %889 = vmatpush2.msra.mxu0 0.0
    %890 = vmatprep.subr.mxu0 0.0
    %891 = vmatpush2.msra.mxu0 0.0
    %892 = vmatprep.subr.mxu0 0.0
    %893 = vmatpush2.msra.mxu0 0.0
    %894 = vmatprep.subr.mxu0 0.0
    %895 = vmatpush2.msra.mxu0 0.0
    %896 = vmatprep.subr.mxu0 0.0
    %897 = vmatpush2.msra.mxu0 0.0
    %898 = vmatprep.subr.mxu0 0.0
    %899 = vmatpush2.msra.mxu0 0.0
    %900 = vmatprep.subr.mxu0 0.0
    %901 = vmatpush2.msra.mxu0 %v671
    %902 = vmatprep.subr.mxu0 0.0
    %903 = vmatpush2.msra.mxu0 %v670
    %904 = vmatprep.mubr.f32.mxu0 %v829
    %905 = vmatmul.mubr.f32.gmra.mxu0 %v644
    %v906 = vpop.f32.mrf.mxu0
    %v907 = vadd.f32 %v805, %v906
    %v908 = vpop.f32.mrf.mxu0
    %909 = vmatprep.mubr.f32.mxu0 %v831
    %910 = vmatmul.mubr.f32.gmra.mxu0 %v646
    %v911 = vpop.f32.mrf.mxu0
    %v912 = vadd.f32 %v810, %v911
    %v913 = vpop.f32.mrf.mxu0
    %914 = vmatprep.mubr.f32.mxu0 %v833
    %915 = vmatmul.mubr.f32.gmra.mxu0 %v648
    %v916 = vpop.f32.mrf.mxu0
    %v917 = vadd.f32 %v815, %v916
    %v918 = vpop.f32.mrf.mxu0
    %919 = vmatprep.mubr.f32.mxu0 %v835
    %920 = vmatmul.mubr.f32.gmra.mxu0 %v650
    %v921 = vpop.f32.mrf.mxu0
    %v922 = vadd.f32 %v820, %v921
    %v923 = vpop.f32.mrf.mxu0
    %924 = vmatprep.mubr.f32.mxu0 %v838
    %925 = vmatmul.mubr.f32.gmra.mxu0 %v652
    %v926 = vpop.f32.mrf.mxu0
    %v927 = vadd.f32 %v825, %v926
    %v928 = vpop.f32.mrf.mxu0
    %929 = vdwg.mxu0
    %v930 = vld [vmem:[#allocation3] sm:$0xfc]
    %v931 = vld [vmem:[#allocation3 + $0x8] sm:$0xfc]
    %v932 = vld [vmem:[#allocation3 + $0x40] sm:$0xf]
    %v933 = vld [vmem:[#allocation3 + $0x48] sm:$0xf]
    %s934 = scalar_lea.vmem [#allocation9], 288
    %v935 = vld [vmem:[%s934] sm:$0xff]
    %v936 = vld [vmem:[%s934 + $0x8] sm:$0xff]
    %v937 = vld [vmem:[%s934 + $0x10] sm:$0xff]
    %v938 = vld [vmem:[%s934 + $0x18] sm:$0xff]
    %v939 = vld [vmem:[%s934 + $0x20] sm:$0xff]
    %v940 = vld [vmem:[%s934 + $0x28] sm:$0xff]
    %v941 = vld [vmem:[%s934 + $0x30] sm:$0xff]
    %v942 = vld [vmem:[%s934 + $0x38] sm:$0xff]
    %v943 = vld [vmem:[%s934 + $0x40] sm:$0xff]
    %v944 = vld [vmem:[%s934 + $0x48] sm:$0xff]
    %v945 = vld [vmem:[%s934 + $0x50] sm:$0xff]
    %v946 = vld [vmem:[%s934 + $0x58] sm:$0xff]
    %v947 = vld [vmem:[%s934 + $0x60] sm:$0xff]
    %v948 = vld [vmem:[%s934 + $0x68] sm:$0xff]
    %v949 = vld [vmem:[%s934 + $0x70] sm:$0xff]
    %v950 = vld [vmem:[%s934 + $0x78] sm:$0xff]
    %v951 = vld [vmem:[%s934 + $0x80] sm:$0xff]
    %v952 = vld [vmem:[%s934 + $0x88] sm:$0xff]
    %v957 = vrot.slane %v930, 2
    %v958 = vrot.slane %v646, 2
    %v959 = vsel %vm455, %v957, %v958
    %v960 = vrot.slane %v931, 2
    %v961 = vrot.slane %v647, 2
    %v962 = vsel %vm455, %v960, %v961
    %v963 = vrot.slane %v648, 2
    %v964 = vsel %vm455, %v958, %v963
    %v965 = vrot.slane %v649, 2
    %v966 = vsel %vm455, %v961, %v965
    %v967 = vrot.slane %v650, 2
    %v968 = vsel %vm455, %v963, %v967
    %v969 = vrot.slane %v651, 2
    %v970 = vsel %vm455, %v965, %v969
    %v971 = vrot.slane %v932, 2
    %v972 = vsel %vm455, %v967, %v971
    %v973 = vrot.slane %v933, 2
    %v974 = vsel %vm455, %v969, %v973
    %v980 = vsel %vm63, %v962, 0
    %v982 = vsel %vm63, %v966, 0
    %v984 = vsel %vm63, %v970, 0
    %v986 = vsel %vm63, %v974, 0
    %v988 = vsel %vm63, %v973, 0
    %990 = vmatprep.subr.mxu0 0.0
    %991 = vmatpush1.msra.mxu0 %v950
    %992 = vmatprep.subr.mxu0 0.0
    %993 = vmatpush1.msra.mxu0 %v949
    %994 = vmatprep.subr.mxu0 0.0
    %995 = vmatpush1.msra.mxu0 %v948
    %996 = vmatprep.subr.mxu0 0.0
    %997 = vmatpush1.msra.mxu0 %v947
    %998 = vmatprep.subr.mxu0 0.0
    %999 = vmatpush1.msra.mxu0 %v946
    %1000 = vmatprep.subr.mxu0 0.0
    %1001 = vmatpush1.msra.mxu0 %v945
    %1002 = vmatprep.subr.mxu0 0.0
    %1003 = vmatpush1.msra.mxu0 %v944
    %1004 = vmatprep.subr.mxu0 0.0
    %1005 = vmatpush1.msra.mxu0 %v943
    %1006 = vmatprep.subr.mxu0 0.0
    %1007 = vmatpush1.msra.mxu0 %v942
    %1008 = vmatprep.subr.mxu0 0.0
    %1009 = vmatpush1.msra.mxu0 %v941
    %1010 = vmatprep.subr.mxu0 0.0
    %1011 = vmatpush1.msra.mxu0 %v940
    %1012 = vmatprep.subr.mxu0 0.0
    %1013 = vmatpush1.msra.mxu0 %v939
    %1014 = vmatprep.subr.mxu0 0.0
    %1015 = vmatpush1.msra.mxu0 %v938
    %1016 = vmatprep.subr.mxu0 0.0
    %1017 = vmatpush1.msra.mxu0 %v937
    %1018 = vmatprep.subr.mxu0 0.0
    %1019 = vmatpush1.msra.mxu0 %v936
    %1020 = vmatprep.subr.mxu0 0.0
    %1021 = vmatpush1.msra.mxu0 %v935
    %1022 = vmatprep.subr.mxu0 0.0
    %1023 = vmatpush2.msra.mxu0 0.0
    %1024 = vmatprep.subr.mxu0 0.0
    %1025 = vmatpush2.msra.mxu0 0.0
    %1026 = vmatprep.subr.mxu0 0.0
    %1027 = vmatpush2.msra.mxu0 0.0
    %1028 = vmatprep.subr.mxu0 0.0
    %1029 = vmatpush2.msra.mxu0 0.0
    %1030 = vmatprep.subr.mxu0 0.0
    %1031 = vmatpush2.msra.mxu0 0.0
    %1032 = vmatprep.subr.mxu0 0.0
    %1033 = vmatpush2.msra.mxu0 0.0
    %1034 = vmatprep.subr.mxu0 0.0
    %1035 = vmatpush2.msra.mxu0 0.0
    %1036 = vmatprep.subr.mxu0 0.0
    %1037 = vmatpush2.msra.mxu0 0.0
    %1038 = vmatprep.subr.mxu0 0.0
    %1039 = vmatpush2.msra.mxu0 0.0
    %1040 = vmatprep.subr.mxu0 0.0
    %1041 = vmatpush2.msra.mxu0 0.0
    %1042 = vmatprep.subr.mxu0 0.0
    %1043 = vmatpush2.msra.mxu0 0.0
    %1044 = vmatprep.subr.mxu0 0.0
    %1045 = vmatpush2.msra.mxu0 0.0
    %1046 = vmatprep.subr.mxu0 0.0
    %1047 = vmatpush2.msra.mxu0 0.0
    %1048 = vmatprep.subr.mxu0 0.0
    %1049 = vmatpush2.msra.mxu0 0.0
    %1050 = vmatprep.subr.mxu0 0.0
    %1051 = vmatpush2.msra.mxu0 %v952
    %1052 = vmatprep.subr.mxu0 0.0
    %1053 = vmatpush2.msra.mxu0 %v951
    %1054 = vmatprep.mubr.f32.mxu0 %v980
    %1055 = vmatmul.mubr.f32.gmra.mxu0 %v959
    %v1056 = vpop.f32.mrf.mxu0
    %v1057 = vadd.f32 0.0, %v1056
    %v1058 = vpop.f32.mrf.mxu0
    %1059 = vmatprep.mubr.f32.mxu0 %v982
    %1060 = vmatmul.mubr.f32.gmra.mxu0 %v964
    %v1061 = vpop.f32.mrf.mxu0
    %v1062 = vadd.f32 0.0, %v1061
    %v1063 = vpop.f32.mrf.mxu0
    %1064 = vmatprep.mubr.f32.mxu0 %v984
    %1065 = vmatmul.mubr.f32.gmra.mxu0 %v968
    %v1066 = vpop.f32.mrf.mxu0
    %v1067 = vadd.f32 0.0, %v1066
    %v1068 = vpop.f32.mrf.mxu0
    %1069 = vmatprep.mubr.f32.mxu0 %v986
    %1070 = vmatmul.mubr.f32.gmra.mxu0 %v972
    %v1071 = vpop.f32.mrf.mxu0
    %v1072 = vadd.f32 0.0, %v1071
    %v1073 = vpop.f32.mrf.mxu0
    %1074 = vmatprep.mubr.f32.mxu0 %v988
    %1075 = vmatmul.mubr.f32.gmra.mxu0 %v971
    %v1076 = vpop.f32.mrf.mxu0
    %v1077 = vadd.f32 0.0, %v1076
    %v1078 = vpop.f32.mrf.mxu0
    %1079 = vdwg.mxu0
    %v1080 = vadd.f32 %v907, %v1057
    %v1081 = vadd.f32 %v912, %v1062
    %v1082 = vadd.f32 %v917, %v1067
    %v1083 = vadd.f32 %v922, %v1072
    %v1084 = vadd.f32 %v927, %v1077
    %v1085 = vld [vmem:[%s4] sm:$0x1]
    %v1087 = vlaneseq
    %v1088 = vshrl.u32 %v1087, 7
    %v1089 = vsub.s32 0, %v1088
    %v1090 = vrot.slane %v1085, %v1089
    %v1092 = vadd.f32 %v1080, %v1090
    %v1093 = vadd.f32 %v1081, %v1090
    %v1094 = vadd.f32 %v1082, %v1090
    %v1095 = vadd.f32 %v1083, %v1090
    %v1096 = vadd.f32 %v1084, %v1090
    %v1097 = vadd.f32 %v1092, %v84
    %v1098 = vadd.f32 %v1093, %v85
    %v1099 = vmax.f32 %v1097, 0.0
    %v1100 = vmax.f32 %v1098, 0.0
    %1101 = vst [vmem:[#allocation10] sm:$0xff] %v1099
    %1102 = vst [vmem:[#allocation10 + $0x8] sm:$0xff] %v1100
    %vm1103 = vcmask 1041408
    %v1104 = vrot.slane %v87, 6
    %v1105 = vrot.slane %v88, 6
    %v1106 = vsel %vm1103, %v1104, %v1105
    %v1110 = vadd.f32 %v1094, %v1104
    %v1111 = vadd.f32 %v1095, %v1106
    %v1112 = vadd.f32 %v1096, %v1105
    %v1113 = vmax.f32 %v1110, 0.0
    %v1114 = vmax.f32 %v1111, 0.0
    %v1115 = vmax.f32 %v1112, 0.0
    %s1116 = scalar_lea.vmem [#allocation10], 16
    %1117 = vst [vmem:[%s1116 - $0x2] sm:$0xfc] %v1113
    %1118 = vst [vmem:[%s1116 + $0x6] sm:$0xff] %v1114
    %1119 = vst [vmem:[%s1116 + $0xe] sm:$0x3] %v1115
    // Predicated region
    $region34: #{tpu_custom_call.1} parent=1 // pred_check
      _
    $region35: #{tpu_custom_call.1} parent=1 // pred_check_branch
      %1121 = sbr.rel (0) target = $region37
    $region36: #{tpu_custom_call.1} parent=1 // pred_region
      %s1123 = ssub.s32 512, 512
      %1124 = vsyncadd [#allocation6], %s1123
      %s1125 = sshll.u32 [#allocation10], 4
      %s1126 = int_to_ptr.vmem [resolvable:$true] %s1125
      %1131 = dma.vmem_to_hbm [thread:$0]  %s1126, 512, %s5, [#allocation6], 128, 128, 8
    $region37: #{tpu_custom_call.1} parent=1 // pred_fallthru
      _
    // Predicated region
    $region38: #{tpu_custom_call.1} parent=1 // pred_check
      _
    $region39: #{tpu_custom_call.1} parent=1 // pred_check_branch
      %1133 = sbr.rel (0) target = $region41
    $region40: #{tpu_custom_call.1} parent=1 // pred_region
      %1134 = dma.done [#allocation6], 512
    $region41: #{tpu_custom_call.1} parent=1 // pred_fallthru
      _
    %1135 = vsyncpa [#allocation5], 1
    %1136 = vsyncpa [#allocation8], 1
    %1137 = vsyncpa [#allocation6], 1

</llo_original>
